<compile_context>
chip_gen: v6e
topology: v6e:2x2x1
jax: 0.10.0
libtpu: 0.0.40
codegen_flags: <defaults>
</compile_context>

<pallas_src>
import numpy as np
import jax
import jax.numpy as jnp
from jax.experimental import pallas as pl
from jax.experimental.pallas import tpu as pltpu


def _band_slices(F, n_band, overlap):
    """Replicate the PyTorch loop's (idx, sz_band) evolution exactly (static).

    Note: once sz_band shrinks at the tail, later bands keep the shrunken size —
    this mirrors the in-place mutation in the reference forward().
    """
    sz_band0 = int(np.ceil(F / (n_band * (1.0 - overlap))))
    slices = []
    idx = 0
    sz_band = sz_band0
    for _ in range(n_band):
        if idx + sz_band > F:
            sz_band = F - idx
        slices.append((idx, sz_band))          # sz_band may be <= 0 (writes nothing)
        idx = idx + int(sz_band * (1.0 - overlap))
    return sz_band0, slices


def _vmem_limits():
    """(tile budget for double-buffered blocks, vmem_limit_bytes) per generation."""
    try:
        cap = int(pltpu.get_tpu_info().vmem_capacity_bytes)
    except Exception:
        cap = 128 << 20
    if cap <= (64 << 20):            # v7x-class: 64 MiB physical per TensorCore
        return 16 << 20, 48 << 20
    return 32 << 20, 64 << 20        # v5e/v6e: 128 MiB physical (scoped default 16/32)


def _pick_tiles(B, T, C, F, out_C, sz_band0, itemsize, budget, min_steps=2):
    """Choose (Bb, TT) so double-buffered in+out blocks fit `budget` bytes.

    Prefers full-T lane... (here sublane) extent and packs batches per step when
    blocks are small; then splits so the grid has >= min_steps steps (v7x cores).
    """
    per_bt = (C * F + out_C * sz_band0) * itemsize     # bytes per (batch, time) column
    max_elems = max(1, budget // (2 * per_bt))         # allowed Bb * TT
    if T <= max_elems:
        TT = T
        Bb = max(1, min(B, max_elems // T))
    else:
        Bb = 1
        TT = min(T, max(8, (max_elems // 8) * 8))      # TT multiple of 8 when < T
        # TODO(synk): if this ever forces TT <= 256 for huge C*F, tile F instead.

    def n_steps(bb, tt):
        return pl.cdiv(B, bb) * pl.cdiv(T, tt)

    # Guarantee >= min_steps grid steps (both v7x TCs get work; pipeline overlap).
    while n_steps(Bb, TT) < min_steps:
        if Bb > 1:
            Bb = (Bb + 1) // 2
        elif TT > 8:
            TT = max(8, (((TT + 1) // 2) + 7) // 8 * 8)
        else:
            break
    return Bb, TT


def cr_forward(x, n_band, overlap=1.0 / 3.0):
    """Pallas implementation of CR.forward. x: (B, C, T, F)."""
    B, C, T, F = x.shape
    sz_band0, slices = _band_slices(F, n_band, overlap)
    out_C = n_band * C

    budget, vmem_limit = _vmem_limits()
    Bb, TT = _pick_tiles(B, T, C, F, out_C, sz_band0,
                         np.dtype(x.dtype).itemsize, budget)
    grid = (pl.cdiv(B, Bb), pl.cdiv(T, TT))

    def kernel(x_ref, y_ref):
        # x_ref: (Bb, C, TT, F); y_ref: (Bb, out_C, TT, sz_band0)
        # All band starts/sizes are trace-time constants -> fully unrolled copies
        # on the lane (F) axis.  Pallas does NOT pre-zero output blocks, so only
        # the regions no band copy covers are zeroed explicitly.
        for i, (start, sz) in enumerate(slices):
            lo, hi = i * C, (i + 1) * C
            if sz >= sz_band0:
                # Full band: covers the whole [0, sz_band0) lane range.
                y_ref[:, lo:hi, :, :] = x_ref[:, :, :, start:start + sz_band0]
            elif sz > 0:
                # Shrunken tail band: copy sz lanes, zero the remaining pad lanes.
                y_ref[:, lo:hi, :, 0:sz] = x_ref[:, :, :, start:start + sz]
                y_ref[:, lo:hi, :, sz:sz_band0] = jnp.zeros(
                    (Bb, C, TT, sz_band0 - sz), dtype=y_ref.dtype)
            else:
                # Degenerate band: reference writes nothing -> stays all zeros.
                y_ref[:, lo:hi, :, :] = jnp.zeros(
                    (Bb, C, TT, sz_band0), dtype=y_ref.dtype)

    return pl.pallas_call(
        kernel,
        out_shape=jax.ShapeDtypeStruct((B, out_C, T, sz_band0), x.dtype),
        grid=grid,
        in_specs=[pl.BlockSpec((Bb, C, TT, F), lambda b, t: (b, 0, t, 0))],
        out_specs=pl.BlockSpec((Bb, out_C, TT, sz_band0), lambda b, t: (b, 0, t, 0)),
        compiler_params=pltpu.CompilerParams(
            dimension_semantics=("parallel", "parallel"),
            vmem_limit_bytes=vmem_limit,
        ),
    )(x)


def cr_reference(x, n_band, overlap=1.0 / 3.0):
    """Pure numpy reference replicating the PyTorch forward literally."""
    x = np.asarray(x)
    B, C, T, F = x.shape
    sz_band = int(np.ceil(F / (n_band * (1.0 - overlap))))
    y = np.zeros((B, n_band * C, T, sz_band), dtype=x.dtype)
    idx = 0
    for i in range(n_band):
        if idx + sz_band > F:
            sz_band = F - idx
        if sz_band > 0:
            y[:, i * C:(i + 1) * C, :, :sz_band] = x[:, :, :, idx:idx + sz_band]
        idx = idx + int(sz_band * (1.0 - overlap))
    return y


if __name__ == "__main__":
    # Small shapes consistent with the module: B=2, C=4, T=16, F=16, n_band=3.
    key = jax.random.PRNGKey(0)
    B, C, T, F = 2, 4, 16, 16
    n_band = 3
    x = jax.random.normal(key, (B, C, T, F), dtype=jnp.float32)

    y = cr_forward(x, n_band)
    y = jax.block_until_ready(y)

    y_ref = cr_reference(np.asarray(x), n_band)
    assert y.shape == y_ref.shape, (y.shape, y_ref.shape)
    np.testing.assert_allclose(np.asarray(y), y_ref, rtol=0, atol=0)

    print("KERNEL_OK")
</pallas_src>

<mosaic_0001>
module attributes {stable_mosaic.version = 11 : i64} {
  func.func @kernel(%arg0: i32, %arg1: i32, %arg2: memref<1x4x16x16xf32, #tpu.memory_space<vmem>>, %arg3: memref<1x12x16x8xf32, #tpu.memory_space<vmem>>) attributes {dimension_semantics = [#tpu.dimension_semantics<parallel>, #tpu.dimension_semantics<parallel>], iteration_bounds = array<i64: 2, 1>, scalar_prefetch = 0 : i64, scratch_operands = 0 : i64, tpu.core_type = #tpu.core_type<tc>, window_params = [{transform_indices = @transform_0, window_bounds = array<i64: 1, 4, 16, 16>}, {transform_indices = @transform_1, window_bounds = array<i64: 1, 12, 16, 8>}]} {
    %c0 = arith.constant 0 : index
    %c0_0 = arith.constant 0 : index
    %c0_1 = arith.constant 0 : index
    %c0_2 = arith.constant 0 : index
    %0 = vector.load %arg2[%c0, %c0_0, %c0_1, %c0_2] : memref<1x4x16x16xf32, #tpu.memory_space<vmem>>, vector<1x4x16x8xf32>
    %c0_3 = arith.constant 0 : index
    %c0_4 = arith.constant 0 : index
    %c0_5 = arith.constant 0 : index
    %c0_6 = arith.constant 0 : index
    %1 = vector.load %arg3[%c0_3, %c0_4, %c0_5, %c0_6] : memref<1x12x16x8xf32, #tpu.memory_space<vmem>>, vector<1x4x16x8xf32>
    tpu.vector_store %arg3[%c0_3, %c0_4, %c0_5, %c0_6], %0 {strides = array<i32>} : memref<1x12x16x8xf32, #tpu.memory_space<vmem>>, vector<1x4x16x8xf32>,
    %c0_7 = arith.constant 0 : index
    %c0_8 = arith.constant 0 : index
    %c0_9 = arith.constant 0 : index
    %c5 = arith.constant 5 : index
    %2 = vector.load %arg2[%c0_7, %c0_8, %c0_9, %c5] : memref<1x4x16x16xf32, #tpu.memory_space<vmem>>, vector<1x4x16x8xf32>
    %c0_10 = arith.constant 0 : index
    %c4 = arith.constant 4 : index
    %c0_11 = arith.constant 0 : index
    %c0_12 = arith.constant 0 : index
    %3 = vector.load %arg3[%c0_10, %c4, %c0_11, %c0_12] : memref<1x12x16x8xf32, #tpu.memory_space<vmem>>, vector<1x4x16x8xf32>
    tpu.vector_store %arg3[%c0_10, %c4, %c0_11, %c0_12], %2 {strides = array<i32>} : memref<1x12x16x8xf32, #tpu.memory_space<vmem>>, vector<1x4x16x8xf32>,
    %c0_13 = arith.constant 0 : index
    %c0_14 = arith.constant 0 : index
    %c0_15 = arith.constant 0 : index
    %c10 = arith.constant 10 : index
    %4 = vector.load %arg2[%c0_13, %c0_14, %c0_15, %c10] : memref<1x4x16x16xf32, #tpu.memory_space<vmem>>, vector<1x4x16x6xf32>
    %c0_16 = arith.constant 0 : index
    %c8 = arith.constant 8 : index
    %c0_17 = arith.constant 0 : index
    %c0_18 = arith.constant 0 : index
    %5 = vector.load %arg3[%c0_16, %c8, %c0_17, %c0_18] : memref<1x12x16x8xf32, #tpu.memory_space<vmem>>, vector<1x4x16x6xf32>
    tpu.vector_store %arg3[%c0_16, %c8, %c0_17, %c0_18], %4 {strides = array<i32>} : memref<1x12x16x8xf32, #tpu.memory_space<vmem>>, vector<1x4x16x6xf32>,
    %cst = arith.constant 0.000000e+00 : f32
    %6 = vector.broadcast %cst : f32 to vector<1x4x16x2xf32>
    %c0_19 = arith.constant 0 : index
    %c8_20 = arith.constant 8 : index
    %c0_21 = arith.constant 0 : index
    %c6 = arith.constant 6 : index
    %7 = vector.load %arg3[%c0_19, %c8_20, %c0_21, %c6] : memref<1x12x16x8xf32, #tpu.memory_space<vmem>>, vector<1x4x16x2xf32>
    tpu.vector_store %arg3[%c0_19, %c8_20, %c0_21, %c6], %6 {strides = array<i32>} : memref<1x12x16x8xf32, #tpu.memory_space<vmem>>, vector<1x4x16x2xf32>,
    return
  }
  func.func @transform_0(%arg0: i32, %arg1: i32) -> (i32, i32, i32, i32) {
    %c0_i32 = arith.constant 0 : i32
    %c0_i32_0 = arith.constant 0 : i32
    %c0_i32_1 = arith.constant 0 : i32
    return %arg0, %c0_i32, %arg1, %c0_i32_0 : i32, i32, i32, i32
  }
  func.func @transform_1(%arg0: i32, %arg1: i32) -> (i32, i32, i32, i32) {
    %c0_i32 = arith.constant 0 : i32
    %c0_i32_0 = arith.constant 0 : i32
    %c0_i32_1 = arith.constant 0 : i32
    return %arg0, %c0_i32, %arg1, %c0_i32_0 : i32, i32, i32, i32
  }
}

</mosaic_0001>

<llo_original>
// kernel: tpu_custom_call.1
$region0: #{tpu_custom_call.1}
  #allocation0 [shape = 'u32[]', space=smem, size = 0x4, offset = 0x4, fixed_abs, tag = 'smem constant byte address 0x4 - core index']
  #allocation1 [shape = 'u32[144,128]{1,0:T(1,128)}', space=vmem, size = 0x12000, scoped, tag = 'internal scratch']
  %s0 = inlined_call_operand.hbm [shape: f32[2,4,16,16], index: 0, kind: input, shape index: {}]
  %s1 = inlined_call_operand.vmem [shape: f32[2,12,16,8], index: 1, kind: output, shape index: {}]
  %s2 = sld [smem:[#allocation0]]
  $region41: #{tpu_custom_call.1} parent=0
    _
  %s4 = ssub.s32 1, %s2
  %s5 = scalar_select 0, %s4, %s2
  $region1: #{tpu_custom_call.1} parent=0
    #allocation2 [shape = 'u8[65536]{0}', space=vmem, size = 0x10000, scoped, tag = 'input window, operand 0']
    #allocation3 [shape = 's32[2]{0}', space=sflag, size = 0x8, scoped, tag = 'scoped memory for tpu_custom_call.1']
    %6 = vsyncpa [#allocation3], 0
    %s7 = scalar_lea.sflag [#allocation3], 1
    %8 = vsyncpa %s7, 0
    loop: start=0, step=1, limit=4
    $region2: #{tpu_custom_call.1} parent=1 // loop_pre_header
      _
    $region3: #{tpu_custom_call.1} parent=1 // loop_header
      %s10 = sphi 0, %s14
      %p11 = scmp.ge.s32.totalorder %s10, 4
      %s17 = sphi 0, %s29
      %s18 = sphi 0, %s25
      %s19 = sphi 0, %s17
      %s20 = sphi 0, %s18
      %s21 = sphi 0, %s19
      %s22 = sphi 0, %s20
      %s34 = sphi 0, %s36
      %s37 = sphi 0, %s34
      %s38 = sphi 0, %s37
      %s54 = sphi 0, %s38
      %s62 = sphi 0, %s64
      %s65 = sphi 0, %s62
      %s66 = sphi 0, %s65
      %s82 = sphi 0, %s66
    $region4: #{tpu_custom_call.1} parent=1 // loop_header_branch
      %13 = sbr.rel (%p11) target = $region8
    $region5: #{tpu_custom_call.1} parent=1 // loop_body
      %s15 = ssub.s32 %s10, 1
      %s16 = ssub.s32 %s10, 2
      %s23 = sadd.s32 1, %s18
      %p24 = scmp.ge.s32.totalorder %s23, 1
      %s25 = scalar_select %p24, 0, %s23
      %s26 = sadd.s32 1, %s17
      %s27 = scalar_select %p24, %s26, %s17
      %p28 = scmp.ge.s32.totalorder %s27, 2
      %s29 = scalar_select %p28, 0, %s27
      %s30 = ssub.s32 %s17, %s29
      %s31 = ssub.s32 %s18, %s25
      %s32 = sor.u32 %s30, %s31
      %p33 = scmp.eq.s32.totalorder %s32, 0
      %s35 = sadd.s32 %s34, 1
      %s36 = scalar_select %p33, %s34, %s35
      %p39 = pneg %p33
      %p40 = scmp.eq.s32.totalorder %s10, 1
      %p41 = por %p39, %p40
      %p42 = scmp.ne.s32.totalorder %s34, %s37
      %p43 = scmp.eq.s32.totalorder %s10, 0
      %p44 = por %p42, %p43
      %p45 = scmp.ne.s32.totalorder %s34, %s37
      %p46 = scmp.eq.s32.totalorder %s15, 1
      %p47 = por %p45, %p46
      %p48 = scmp.ne.s32.totalorder %s37, %s38
      %p49 = scmp.eq.s32.totalorder %s15, 0
      %p50 = por %p48, %p49
      %p51 = scmp.ne.s32.totalorder %s37, %s38
      %p52 = scmp.eq.s32.totalorder %s16, 1
      %p53 = por %p51, %p52
      %p55 = scmp.ne.s32.totalorder %s38, %s54
      %p56 = scmp.eq.s32.totalorder %s16, 0
      %p57 = por %p55, %p56
      %s58 = ssub.s32 %s17, %s29
      %s59 = ssub.s32 %s18, %s25
      %s60 = sor.u32 %s58, %s59
      %p61 = scmp.eq.s32.totalorder %s60, 0
      %s63 = sadd.s32 %s62, 1
      %s64 = scalar_select %p61, %s62, %s63
      %p67 = pneg %p61
      %p68 = scmp.eq.s32.totalorder %s10, 1
      %p69 = por %p67, %p68
      %p70 = scmp.ne.s32.totalorder %s62, %s65
      %p71 = scmp.eq.s32.totalorder %s10, 0
      %p72 = por %p70, %p71
      %p73 = scmp.ne.s32.totalorder %s62, %s65
      %p74 = scmp.eq.s32.totalorder %s15, 1
      %p75 = por %p73, %p74
      %p76 = scmp.ne.s32.totalorder %s65, %s66
      %p77 = scmp.eq.s32.totalorder %s15, 0
      %p78 = por %p76, %p77
      %p79 = scmp.ne.s32.totalorder %s65, %s66
      %p80 = scmp.eq.s32.totalorder %s16, 1
      %p81 = por %p79, %p80
      %p83 = scmp.ne.s32.totalorder %s66, %s82
      %p84 = scmp.eq.s32.totalorder %s16, 0
      %p85 = por %p83, %p84
      %p86 = scmp.le.s32.totalorder 1, %s10
      %p87 = scmp.lt.s32.totalorder %s10, 3
      %p88 = pnand %p86, %p87
      %p89 = pneg %p88
      // Predicated region
      $region9: #{tpu_custom_call.1} parent=5 // pred_check
        _
      $region10: #{tpu_custom_call.1} parent=5 // pred_check_branch
        %91 = sbr.rel (%p88) target = $region12
      $region11: #{tpu_custom_call.1} parent=5 // pred_region
        %s92 = ssub.s32 %s10, 1
      $region12: #{tpu_custom_call.1} parent=5 // pred_fallthru
        _
      %p93 = scmp.lt.s32.totalorder %s10, 2
      // Predicated region
      $region13: #{tpu_custom_call.1} parent=5 // pred_check
        %p94 = pneg %p93
      $region14: #{tpu_custom_call.1} parent=5 // pred_check_branch
        %96 = sbr.rel (%p94) target = $region16
      $region15: #{tpu_custom_call.1} parent=5 // pred_region
        // Predicated region
        $region17: #{tpu_custom_call.1} parent=15 // pred_check
          %p97 = pneg %p44
        $region18: #{tpu_custom_call.1} parent=15 // pred_check_branch
          %99 = sbr.rel (%p97) target = $region20
        $region19: #{tpu_custom_call.1} parent=15 // pred_region
          %s100 = sand.u32 %s34, 1
          %s101 = scalar_lea.sflag [#allocation3], %s100
          %s102 = sand.u32 %s34, 1
          %s103 = smul.addr %s102, 64
          %s104 = scalar_lea.vmem [#allocation2], %s103
          %s105 = smul.u32 2, %s18
          %s107 = ssub.s32 1024, 1024
          %108 = vsyncadd %s101, %s107
          %s109 = smul.addr %s17, 8
          %s110 = sadd.s32 %s105, %s109
          %s111 = smul.addr %s110, 128
          %s112 = scalar_lea.hbm %s0, %s111
          %s113 = sshll.u32 %s104, 4
          %s114 = int_to_ptr.vmem [resolvable:$true] %s113
          %119 = dma.hbm_to_vmem [thread:$0]  %s112, 1024, %s114, %s101, 128, 128, 8
        $region20: #{tpu_custom_call.1} parent=15 // pred_fallthru
          _
      $region16: #{tpu_custom_call.1} parent=5 // pred_fallthru
        _
      %p120 = scmp.le.s32.totalorder 1, %s10
      %p121 = scmp.lt.s32.totalorder %s10, 3
      %p122 = pnand %p120, %p121
      %p123 = pneg %p122
      // Predicated region
      $region21: #{tpu_custom_call.1} parent=5 // pred_check
        _
      $region22: #{tpu_custom_call.1} parent=5 // pred_check_branch
        %125 = sbr.rel (%p122) target = $region24
      $region23: #{tpu_custom_call.1} parent=5 // pred_region
        %s126 = ssub.s32 %s10, 1
        %s127 = sand.u32 %s37, 1
        %s128 = scalar_lea.sflag [#allocation3], %s127
        %s129 = sand.u32 %s37, 1
        %s130 = smul.addr %s129, 64
        %s131 = scalar_lea.vmem [#allocation2], %s130
        // Predicated region
        $region25: #{tpu_custom_call.1} parent=23 // pred_check
          %p132 = pneg %p50
        $region26: #{tpu_custom_call.1} parent=23 // pred_check_branch
          %134 = sbr.rel (%p132) target = $region28
        $region27: #{tpu_custom_call.1} parent=23 // pred_region
          %135 = dma.done %s128, 1024
        $region28: #{tpu_custom_call.1} parent=23 // pred_fallthru
          _
        %s136 = sand.u32 %s37, 1
        %s137 = scalar_lea.sflag [#allocation3], %s136
        %s138 = sand.u32 %s37, 1
        %s139 = smul.addr %s138, 64
        %s140 = scalar_lea.vmem [#allocation2], %s139
        %p141 = pneg %p50
        %p142 = pneg %p47
        %p143 = pneg %p78
        %p144 = pneg %p75
        %s145 = smul.u32 2, %s20
        %p146 = scmp.lt.s32.totalorder %s19, 1
        %s147 = scalar_select %p146, %s19, 1
        %p148 = scmp.lt.s32.totalorder %s145, 1
        %s149 = scalar_select %p148, %s145, 1
        %s150 = smul.addr %s147, 24
        %s151 = sadd.s32 %s149, %s150
        %s152 = smul.addr %s151, 8
        %s153 = scalar_lea.vmem %s1, %s152
        %s154 = smul.u32 2, %s20
        %s155 = smul.u32 2, %s20
        %p156 = scmp.lt.s32.totalorder %s19, 1
        %s157 = scalar_select %p156, %s19, 1
        %p158 = scmp.lt.s32.totalorder %s155, 1
        %s159 = scalar_select %p158, %s155, 1
        %s160 = smul.addr %s157, 24
        %s161 = sadd.s32 %s159, %s160
        %s162 = smul.addr %s161, 8
        %s163 = scalar_lea.vmem %s1, %s162
        %s164 = smul.u32 2, %s20
        %v165 = vld [vmem:[%s131] sm:$0xff]
        %v166 = vld [vmem:[%s131 + $0x8] sm:$0xff]
        %v167 = vld [vmem:[%s131 + $0x10] sm:$0xff]
        %v168 = vld [vmem:[%s131 + $0x18] sm:$0xff]
        %v169 = vld [vmem:[%s131 + $0x20] sm:$0xff]
        %v170 = vld [vmem:[%s131 + $0x28] sm:$0xff]
        %v171 = vld [vmem:[%s131 + $0x30] sm:$0xff]
        %v172 = vld [vmem:[%s131 + $0x38] sm:$0xff]
        %vm173 = vcmask 64512
        %174 = vst.msk [vmem:[%s163] sm:$0xff] %vm173, %v165
        %175 = vst.msk [vmem:[%s163 + $0x8] sm:$0xff] %vm173, %v166
        %176 = vst.msk [vmem:[%s163 + $0x10] sm:$0xff] %vm173, %v167
        %177 = vst.msk [vmem:[%s163 + $0x18] sm:$0xff] %vm173, %v168
        %178 = vst.msk [vmem:[%s163 + $0x20] sm:$0xff] %vm173, %v169
        %179 = vst.msk [vmem:[%s163 + $0x28] sm:$0xff] %vm173, %v170
        %180 = vst.msk [vmem:[%s163 + $0x30] sm:$0xff] %vm173, %v171
        %181 = vst.msk [vmem:[%s163 + $0x38] sm:$0xff] %vm173, %v172
        %v182 = vld [vmem:[%s131] sm:$0xff]
        %v183 = vld [vmem:[%s131 + $0x8] sm:$0xff]
        %v184 = vld [vmem:[%s131 + $0x10] sm:$0xff]
        %v185 = vld [vmem:[%s131 + $0x18] sm:$0xff]
        %v186 = vld [vmem:[%s131 + $0x20] sm:$0xff]
        %v187 = vld [vmem:[%s131 + $0x28] sm:$0xff]
        %v188 = vld [vmem:[%s131 + $0x30] sm:$0xff]
        %v189 = vld [vmem:[%s131 + $0x38] sm:$0xff]
        %198 = vrot.lane.b32.xlu0 %v182, 123
        %v199 = vpop.permute.xlu0 %198
        %200 = vrot.lane.b32.xlu0 %v183, 123
        %v201 = vpop.permute.xlu0 %200
        %202 = vrot.lane.b32.xlu0 %v184, 123
        %v203 = vpop.permute.xlu0 %202
        %204 = vrot.lane.b32.xlu0 %v185, 123
        %v205 = vpop.permute.xlu0 %204
        %206 = vrot.lane.b32.xlu0 %v186, 123
        %v207 = vpop.permute.xlu0 %206
        %208 = vrot.lane.b32.xlu0 %v187, 123
        %v209 = vpop.permute.xlu0 %208
        %210 = vrot.lane.b32.xlu0 %v188, 123
        %v211 = vpop.permute.xlu0 %210
        %212 = vrot.lane.b32.xlu0 %v189, 123
        %v213 = vpop.permute.xlu0 %212
        %s222 = scalar_lea.vmem %s163, 64
        %223 = vst.msk [vmem:[%s222] sm:$0xff] %vm173, %v199
        %224 = vst.msk [vmem:[%s222 + $0x8] sm:$0xff] %vm173, %v201
        %225 = vst.msk [vmem:[%s222 + $0x10] sm:$0xff] %vm173, %v203
        %226 = vst.msk [vmem:[%s222 + $0x18] sm:$0xff] %vm173, %v205
        %227 = vst.msk [vmem:[%s222 + $0x20] sm:$0xff] %vm173, %v207
        %228 = vst.msk [vmem:[%s222 + $0x28] sm:$0xff] %vm173, %v209
        %229 = vst.msk [vmem:[%s222 + $0x30] sm:$0xff] %vm173, %v211
        %230 = vst.msk [vmem:[%s222 + $0x38] sm:$0xff] %vm173, %v213
        %v231 = vld [vmem:[%s131] sm:$0xff]
        %v232 = vld [vmem:[%s131 + $0x8] sm:$0xff]
        %v233 = vld [vmem:[%s131 + $0x10] sm:$0xff]
        %v234 = vld [vmem:[%s131 + $0x18] sm:$0xff]
        %v235 = vld [vmem:[%s131 + $0x20] sm:$0xff]
        %v236 = vld [vmem:[%s131 + $0x28] sm:$0xff]
        %v237 = vld [vmem:[%s131 + $0x30] sm:$0xff]
        %v238 = vld [vmem:[%s131 + $0x38] sm:$0xff]
        %247 = vrot.lane.b32.xlu0 %v231, 118
        %v248 = vpop.permute.xlu0 %247
        %249 = vrot.lane.b32.xlu0 %v232, 118
        %v250 = vpop.permute.xlu0 %249
        %251 = vrot.lane.b32.xlu0 %v233, 118
        %v252 = vpop.permute.xlu0 %251
        %253 = vrot.lane.b32.xlu0 %v234, 118
        %v254 = vpop.permute.xlu0 %253
        %255 = vrot.lane.b32.xlu0 %v235, 118
        %v256 = vpop.permute.xlu0 %255
        %257 = vrot.lane.b32.xlu0 %v236, 118
        %v258 = vpop.permute.xlu0 %257
        %259 = vrot.lane.b32.xlu0 %v237, 118
        %v260 = vpop.permute.xlu0 %259
        %261 = vrot.lane.b32.xlu0 %v238, 118
        %v262 = vpop.permute.xlu0 %261
        %s271 = scalar_lea.vmem %s163, 128
        %vm272 = vcmask 48128
        %273 = vst.msk [vmem:[%s271] sm:$0xff] %vm272, %v248
        %274 = vst.msk [vmem:[%s271 + $0x8] sm:$0xff] %vm272, %v250
        %275 = vst.msk [vmem:[%s271 + $0x10] sm:$0xff] %vm272, %v252
        %276 = vst.msk [vmem:[%s271 + $0x18] sm:$0xff] %vm272, %v254
        %277 = vst.msk [vmem:[%s271 + $0x20] sm:$0xff] %vm272, %v256
        %278 = vst.msk [vmem:[%s271 + $0x28] sm:$0xff] %vm272, %v258
        %279 = vst.msk [vmem:[%s271 + $0x30] sm:$0xff] %vm272, %v260
        %280 = vst.msk [vmem:[%s271 + $0x38] sm:$0xff] %vm272, %v262
        %vm281 = vcmask 64560
        %282 = vst.msk [vmem:[%s271] sm:$0xff] %vm281, 0.0
        %283 = vst.msk [vmem:[%s271 + $0x8] sm:$0xff] %vm281, 0.0
        %284 = vst.msk [vmem:[%s271 + $0x10] sm:$0xff] %vm281, 0.0
        %285 = vst.msk [vmem:[%s271 + $0x18] sm:$0xff] %vm281, 0.0
        %286 = vst.msk [vmem:[%s271 + $0x20] sm:$0xff] %vm281, 0.0
        %287 = vst.msk [vmem:[%s271 + $0x28] sm:$0xff] %vm281, 0.0
        %288 = vst.msk [vmem:[%s271 + $0x30] sm:$0xff] %vm281, 0.0
        %289 = vst.msk [vmem:[%s271 + $0x38] sm:$0xff] %vm281, 0.0
        %s290 = smul.u32 2, %s20
        %p291 = scmp.lt.s32.totalorder %s19, 1
        %s292 = scalar_select %p291, %s19, 1
        %p293 = scmp.lt.s32.totalorder %s290, 1
        %s294 = scalar_select %p293, %s290, 1
        %s295 = smul.addr %s292, 24
        %s296 = sadd.s32 %s294, %s295
        %s297 = smul.addr %s296, 8
        %s298 = scalar_lea.vmem %s1, %s297
        // Predicated region
        $region29: #{tpu_custom_call.1} parent=23 // pred_check
          %p299 = pneg %p75
        $region30: #{tpu_custom_call.1} parent=23 // pred_check_branch
          %301 = sbr.rel (%p299) target = $region32
        $region31: #{tpu_custom_call.1} parent=23 // pred_region
          %s302 = smul.u32 2, %s20
        $region32: #{tpu_custom_call.1} parent=23 // pred_fallthru
          _
      $region24: #{tpu_custom_call.1} parent=5 // pred_fallthru
        _
      %p303 = scmp.le.s32.totalorder 2, %s10
      // Predicated region
      $region33: #{tpu_custom_call.1} parent=5 // pred_check
        %p304 = pneg %p303
      $region34: #{tpu_custom_call.1} parent=5 // pred_check_branch
        %306 = sbr.rel (%p304) target = $region36
      $region35: #{tpu_custom_call.1} parent=5 // pred_region
        %s307 = ssub.s32 %s10, 2
        // Predicated region
        $region37: #{tpu_custom_call.1} parent=35 // pred_check
          %p308 = pneg %p81
        $region38: #{tpu_custom_call.1} parent=35 // pred_check_branch
          %310 = sbr.rel (%p308) target = $region40
        $region39: #{tpu_custom_call.1} parent=35 // pred_region
          %s311 = smul.u32 2, %s22
          %p312 = scmp.lt.s32.totalorder %s21, 1
          %s313 = scalar_select %p312, %s21, 1
          %p314 = scmp.lt.s32.totalorder %s311, 1
          %s315 = scalar_select %p314, %s311, 1
          %s316 = smul.addr %s313, 24
          %s317 = sadd.s32 %s315, %s316
          %s318 = smul.addr %s317, 8
          %s319 = scalar_lea.vmem %s1, %s318
        $region40: #{tpu_custom_call.1} parent=35 // pred_fallthru
          _
      $region36: #{tpu_custom_call.1} parent=5 // pred_fallthru
        _
    $region6: #{tpu_custom_call.1} parent=1 // loop_footer
      %s14 = sadd.s32 1, %s10
    $region7: #{tpu_custom_call.1} parent=1 // loop_footer_branch
      %9 = sbr.rel target = $region3
    $region8: #{tpu_custom_call.1} parent=1 // loop_exit
      _
    %320 = vsyncpa [#allocation3], 1
    %s321 = scalar_lea.sflag [#allocation3], 1
    %322 = vsyncpa %s321, 1

</llo_original>
